<compile_context>
chip_gen: v5e
topology: v5e:2x2
jax: 0.10.0
libtpu: 0.0.40
codegen_flags: <defaults>
</compile_context>

<pallas_src>
import functools

import jax
import jax.numpy as jnp
from jax.experimental import pallas as pl
from jax.experimental.pallas import tpu as pltpu

POOLED_DIM = 1024
EMB_DIM = 2
D_IN = POOLED_DIM + EMB_DIM + 2     # 1028: [q_emb(2), pooled(1024), gender(1), age(1)]
LANE = 128
X_PAD = 1152                        # 1028 rounded up to 9 lane tiles


def _round_up(n, m=LANE):
    return ((n + m - 1) // m) * m


def _pad2(x, rows, cols):
    return jnp.pad(x, ((0, rows - x.shape[0]), (0, cols - x.shape[1])))


# ----------------------------- Pallas kernel --------------------------------

def _fused_mlp_kernel(*refs, num_layers):
    """Fused MLP head. refs = (x, [W_i, b_i for i in 1..L], out).

    Weights are bf16 (DMA-byte minimized); activations are cast to bf16 only at
    the dot operand; bias-add / ReLU / accumulation stay f32.
    """
    x_ref = refs[0]
    layer_refs = refs[1:-1]
    o_ref = refs[-1]

    y = x_ref[...]                                   # f32 [TB, X_PAD]
    for li in range(num_layers):
        w_ref = layer_refs[2 * li]
        b_ref = layer_refs[2 * li + 1]
        y = jnp.dot(y.astype(jnp.bfloat16), w_ref[...],
                    preferred_element_type=jnp.float32)
        y = y + b_ref[...]
        if li != num_layers - 1:
            y = jnp.maximum(y, 0.0)

    o_ref[...] = y.astype(o_ref.dtype)


def fused_mlp_pallas(x, packed):
    """Single pallas_call running the entire Linear(+ReLU) stack.

    x: [B, X_PAD] f32 (concatenated + zero-padded features), weights resident per
    grid step via index_map (0, 0); batch tiled along a "parallel" grid axis.
    """
    B = x.shape[0]
    layers = packed["layers"]
    num_layers = len(layers)
    num_classes = layers[-1][0].shape[1]

    # Batch tile: full batch for small B; MXU-row-sized tiles for serving batches.
    if B >= 256 and B % 256 == 0:
        tb = 256
    elif B >= 128 and B % 128 == 0:
        tb = 128
    else:
        tb = B
    grid = (B // tb,)

    operands = [x]
    in_specs = [pl.BlockSpec((tb, X_PAD), lambda i: (i, 0))]
    for w, b in layers:
        operands += [w, b]
        in_specs.append(pl.BlockSpec(w.shape, lambda i: (0, 0)))   # weights resident
        in_specs.append(pl.BlockSpec(b.shape, lambda i: (0, 0)))

    kernel = functools.partial(_fused_mlp_kernel, num_layers=num_layers)
    return pl.pallas_call(
        kernel,
        out_shape=jax.ShapeDtypeStruct((B, num_classes), jnp.float32),
        grid=grid,
        in_specs=in_specs,
        out_specs=pl.BlockSpec((tb, num_classes), lambda i: (i, 0)),
        compiler_params=pltpu.CompilerParams(dimension_semantics=("parallel",)),
    )(*operands)


# --------------------------- Parameter creation ------------------------------

def init_params(key, hidden_dim, num_classes=2, emb_dim=EMB_DIM,
                pooled_dim=POOLED_DIM, num_embeddings=60):
    """Deterministic init mirroring the torch module's __init__ (logical shapes).

    Linear weights: xavier_normal_ (std = sqrt(2/(fan_in+fan_out))), stored [in, out].
    Linear biases:  torch default uniform(-1/sqrt(fan_in), 1/sqrt(fan_in)).
    Embedding:      N(0, 1) (torch default).
    """
    dims = [pooled_dim + emb_dim + 2] + list(hidden_dim) + [num_classes]
    keys = jax.random.split(key, 2 * (len(dims) - 1) + 1)
    emb = jax.random.normal(keys[0], (num_embeddings, emb_dim), dtype=jnp.float32)
    weights, biases = [], []
    for i in range(1, len(dims)):
        fan_in, fan_out = dims[i - 1], dims[i]
        std = (2.0 / (fan_in + fan_out)) ** 0.5
        w = std * jax.random.normal(keys[2 * i - 1], (fan_in, fan_out), dtype=jnp.float32)
        bound = 1.0 / (fan_in ** 0.5)
        b = jax.random.uniform(keys[2 * i], (fan_out,), dtype=jnp.float32,
                               minval=-bound, maxval=bound)
        weights.append(w)
        biases.append(b)
    return {"embedding": emb, "weights": weights, "biases": biases}


def pack_params(params):
    """Pad/cast logical params into kernel-ready, lane-dense bf16 operands.

    Row order of weights[0] matches the torch concat: [q_emb(2), pooled(1024),
    gender(1), age(1)] = 1028 rows, zero-padded to 1152.  Hidden widths are
    zero-padded to 128 lanes (exact zeros propagate through ReLU); the final
    layer keeps its true num_classes width (tiny masked store is negligible at
    small B).  Biases stay f32, shaped (1, Dout) at pack time.
    """
    ws, bs = params["weights"], params["biases"]
    num_layers = len(ws)
    num_classes = ws[-1].shape[1]
    in_dims = [X_PAD] + [_round_up(w.shape[1]) for w in ws[:-1]]

    layers = []
    for i, (w, b) in enumerate(zip(ws, bs)):
        out_dim = num_classes if i == num_layers - 1 else _round_up(w.shape[1])
        w_p = _pad2(w, in_dims[i], out_dim).astype(jnp.bfloat16)
        b_p = _pad2(b.reshape(1, -1), 1, out_dim)        # f32
        layers.append((w_p, b_p))

    return {"embedding": params["embedding"], "layers": layers}


# ------------------------------- Forward pass --------------------------------

def mlp_classifier_forward(packed, pooled, gender, age, q_num):
    """Equivalent of MLPClassifier.forward given the base_model pooled output.

    pooled : [B, 1024] float32 (== base_model(...)[1]; dropout = identity at inference)
    gender : [B] numeric  -> float32 column
    age    : [B] numeric  -> float32 column
    q_num  : [B] int32 in [0, 60)
    returns [B, num_classes] float32 logits
    """
    q_emb = jnp.take(packed["embedding"], q_num, axis=0)            # [B, 2]
    x = jnp.concatenate([q_emb,
                         pooled.astype(jnp.float32),
                         gender.reshape(-1, 1).astype(jnp.float32),
                         age.reshape(-1, 1).astype(jnp.float32)], axis=1)  # [B, 1028]
    x = jnp.pad(x, ((0, 0), (0, X_PAD - x.shape[1])))                      # [B, 1152]
    return fused_mlp_pallas(x, packed)


def reference_forward(params, pooled, gender, age, q_num):
    """Pure-JAX f32 reference matching the torch module (for correctness check)."""
    q_emb = jnp.take(params["embedding"], q_num, axis=0)
    x = jnp.concatenate([q_emb, pooled,
                         gender.reshape(-1, 1).astype(jnp.float32),
                         age.reshape(-1, 1).astype(jnp.float32)], axis=1)
    num_layers = len(params["weights"])
    for i, (w, b) in enumerate(zip(params["weights"], params["biases"])):
        x = x @ w + b
        if i != num_layers - 1:
            x = jnp.maximum(x, 0.0)
    return x


# ----------------------------------- Main ------------------------------------

if __name__ == "__main__":
    key = jax.random.PRNGKey(0)
    k_param, k_pool, k_gender, k_age, k_q = jax.random.split(key, 5)

    B = 8
    hidden_dim = [64, 32]            # hidden_dim must be a list, same as torch module
    num_classes = 2

    params = init_params(k_param, hidden_dim, num_classes=num_classes)
    packed = pack_params(params)

    pooled = jax.random.normal(k_pool, (B, POOLED_DIM), dtype=jnp.float32)  # base_model output[1]
    gender = jax.random.randint(k_gender, (B,), 0, 2)                       # {0,1}
    age = jax.random.uniform(k_age, (B,), minval=18.0, maxval=60.0)
    q_num = jax.random.randint(k_q, (B,), 0, 60)                            # embedding indices

    fwd = jax.jit(mlp_classifier_forward)
    logits = fwd(packed, pooled, gender, age, q_num)
    logits = jax.block_until_ready(logits)

    ref = reference_forward(params, pooled, gender, age, q_num)
    max_diff = float(jnp.max(jnp.abs(logits - ref)))
    ref_scale = float(jnp.max(jnp.abs(ref)))
    # bf16 matmul operands (f32 accumulation) -> expect ~1% relative error on logits.
    tol = max(7.5e-2, 3e-2 * ref_scale)

    assert logits.shape == (B, num_classes)
    assert logits.dtype == jnp.float32
    assert max_diff < tol, (
        f"max abs diff {max_diff:.4g} exceeds tol {tol:.4g} (ref scale {ref_scale:.4g})")
    print("KERNEL_OK")
</pallas_src>

<mosaic_0001>
module attributes {stable_mosaic.version = 11 : i64} {
  func.func @_fused_mlp_kernel(%arg0: i32, %arg1: memref<8x1152xf32, #tpu.memory_space<vmem>>, %arg2: memref<1152x128xbf16, #tpu.memory_space<vmem>>, %arg3: memref<1x128xf32, #tpu.memory_space<vmem>>, %arg4: memref<128x128xbf16, #tpu.memory_space<vmem>>, %arg5: memref<1x128xf32, #tpu.memory_space<vmem>>, %arg6: memref<128x2xbf16, #tpu.memory_space<vmem>>, %arg7: memref<1x2xf32, #tpu.memory_space<vmem>>, %arg8: memref<8x2xf32, #tpu.memory_space<vmem>>) attributes {dimension_semantics = [#tpu.dimension_semantics<parallel>], iteration_bounds = array<i64: 1>, scalar_prefetch = 0 : i64, scratch_operands = 0 : i64, tpu.core_type = #tpu.core_type<tc>, window_params = [{transform_indices = @transform_0, window_bounds = array<i64: 8, 1152>}, {pipeline_mode = #tpu.pipeline_mode<synchronous>, transform_indices = @transform_1, window_bounds = array<i64: 1152, 128>}, {pipeline_mode = #tpu.pipeline_mode<synchronous>, transform_indices = @transform_2, window_bounds = array<i64: 1, 128>}, {pipeline_mode = #tpu.pipeline_mode<synchronous>, transform_indices = @transform_3, window_bounds = array<i64: 128, 128>}, {pipeline_mode = #tpu.pipeline_mode<synchronous>, transform_indices = @transform_4, window_bounds = array<i64: 1, 128>}, {pipeline_mode = #tpu.pipeline_mode<synchronous>, transform_indices = @transform_5, window_bounds = array<i64: 128, 2>}, {pipeline_mode = #tpu.pipeline_mode<synchronous>, transform_indices = @transform_6, window_bounds = array<i64: 1, 2>}, {transform_indices = @transform_7, window_bounds = array<i64: 8, 2>}]} {
    %c0 = arith.constant 0 : index
    %c0_0 = arith.constant 0 : index
    %0 = vector.load %arg1[%c0, %c0_0] : memref<8x1152xf32, #tpu.memory_space<vmem>>, vector<8x1152xf32>
    %1 = arith.truncf %0 : vector<8x1152xf32> to vector<8x1152xbf16>
    %c0_1 = arith.constant 0 : index
    %c0_2 = arith.constant 0 : index
    %2 = vector.load %arg2[%c0_1, %c0_2] : memref<1152x128xbf16, #tpu.memory_space<vmem>>, vector<1152x128xbf16>
    %cst = arith.constant dense<0.000000e+00> : vector<8x128xf32>
    %3 = tpu.matmul %1, %2, %cst {dimension_numbers = #tpu.dot_dimension_numbers<[1], [0], [0], [1], [0, 0, 1, 1], [], []>} : vector<8x1152xbf16>, vector<1152x128xbf16>, vector<8x128xf32> -> vector<8x128xf32>
    %c0_3 = arith.constant 0 : index
    %c0_4 = arith.constant 0 : index
    %4 = vector.load %arg3[%c0_3, %c0_4] : memref<1x128xf32, #tpu.memory_space<vmem>>, vector<1x128xf32>
    %5 = vector.broadcast %4 : vector<1x128xf32> to vector<8x128xf32>
    %6 = arith.addf %3, %5 : vector<8x128xf32>
    %cst_5 = arith.constant 0.000000e+00 : f32
    %7 = vector.broadcast %cst_5 : f32 to vector<8x128xf32>
    %8 = arith.maximumf %6, %7 : vector<8x128xf32>
    %9 = arith.truncf %8 : vector<8x128xf32> to vector<8x128xbf16>
    %c0_6 = arith.constant 0 : index
    %c0_7 = arith.constant 0 : index
    %10 = vector.load %arg4[%c0_6, %c0_7] : memref<128x128xbf16, #tpu.memory_space<vmem>>, vector<128x128xbf16>
    %cst_8 = arith.constant dense<0.000000e+00> : vector<8x128xf32>
    %11 = tpu.matmul %9, %10, %cst_8 {dimension_numbers = #tpu.dot_dimension_numbers<[1], [0], [0], [1], [0, 0, 1, 1], [], []>} : vector<8x128xbf16>, vector<128x128xbf16>, vector<8x128xf32> -> vector<8x128xf32>
    %c0_9 = arith.constant 0 : index
    %c0_10 = arith.constant 0 : index
    %12 = vector.load %arg5[%c0_9, %c0_10] : memref<1x128xf32, #tpu.memory_space<vmem>>, vector<1x128xf32>
    %13 = vector.broadcast %12 : vector<1x128xf32> to vector<8x128xf32>
    %14 = arith.addf %11, %13 : vector<8x128xf32>
    %cst_11 = arith.constant 0.000000e+00 : f32
    %15 = vector.broadcast %cst_11 : f32 to vector<8x128xf32>
    %16 = arith.maximumf %14, %15 : vector<8x128xf32>
    %17 = arith.truncf %16 : vector<8x128xf32> to vector<8x128xbf16>
    %c0_12 = arith.constant 0 : index
    %c0_13 = arith.constant 0 : index
    %18 = vector.load %arg6[%c0_12, %c0_13] : memref<128x2xbf16, #tpu.memory_space<vmem>>, vector<128x2xbf16>
    %cst_14 = arith.constant dense<0.000000e+00> : vector<8x2xf32>
    %19 = tpu.matmul %17, %18, %cst_14 {dimension_numbers = #tpu.dot_dimension_numbers<[1], [0], [0], [1], [0, 0, 1, 1], [], []>} : vector<8x128xbf16>, vector<128x2xbf16>, vector<8x2xf32> -> vector<8x2xf32>
    %c0_15 = arith.constant 0 : index
    %c0_16 = arith.constant 0 : index
    %20 = vector.load %arg7[%c0_15, %c0_16] : memref<1x2xf32, #tpu.memory_space<vmem>>, vector<1x2xf32>
    %21 = vector.broadcast %20 : vector<1x2xf32> to vector<8x2xf32>
    %22 = arith.addf %19, %21 : vector<8x2xf32>
    %c0_17 = arith.constant 0 : index
    %c0_18 = arith.constant 0 : index
    %23 = vector.load %arg8[%c0_17, %c0_18] : memref<8x2xf32, #tpu.memory_space<vmem>>, vector<8x2xf32>
    tpu.vector_store %arg8[%c0_17, %c0_18], %22 {strides = array<i32>} : memref<8x2xf32, #tpu.memory_space<vmem>>, vector<8x2xf32>,
    return
  }
  func.func @transform_0(%arg0: i32) -> (i32, i32) {
    %c0_i32 = arith.constant 0 : i32
    %c0_i32_0 = arith.constant 0 : i32
    return %arg0, %c0_i32 : i32, i32
  }
  func.func @transform_1(%arg0: i32) -> (i32, i32) {
    %c0_i32 = arith.constant 0 : i32
    %c0_i32_0 = arith.constant 0 : i32
    %c0_i32_1 = arith.constant 0 : i32
    return %c0_i32, %c0_i32_0 : i32, i32
  }
  func.func @transform_2(%arg0: i32) -> (i32, i32) {
    %c0_i32 = arith.constant 0 : i32
    %c0_i32_0 = arith.constant 0 : i32
    %c0_i32_1 = arith.constant 0 : i32
    return %c0_i32, %c0_i32_0 : i32, i32
  }
  func.func @transform_3(%arg0: i32) -> (i32, i32) {
    %c0_i32 = arith.constant 0 : i32
    %c0_i32_0 = arith.constant 0 : i32
    %c0_i32_1 = arith.constant 0 : i32
    return %c0_i32, %c0_i32_0 : i32, i32
  }
  func.func @transform_4(%arg0: i32) -> (i32, i32) {
    %c0_i32 = arith.constant 0 : i32
    %c0_i32_0 = arith.constant 0 : i32
    %c0_i32_1 = arith.constant 0 : i32
    return %c0_i32, %c0_i32_0 : i32, i32
  }
  func.func @transform_5(%arg0: i32) -> (i32, i32) {
    %c0_i32 = arith.constant 0 : i32
    %c0_i32_0 = arith.constant 0 : i32
    %c0_i32_1 = arith.constant 0 : i32
    return %c0_i32, %c0_i32_0 : i32, i32
  }
  func.func @transform_6(%arg0: i32) -> (i32, i32) {
    %c0_i32 = arith.constant 0 : i32
    %c0_i32_0 = arith.constant 0 : i32
    %c0_i32_1 = arith.constant 0 : i32
    return %c0_i32, %c0_i32_0 : i32, i32
  }
  func.func @transform_7(%arg0: i32) -> (i32, i32) {
    %c0_i32 = arith.constant 0 : i32
    %c0_i32_0 = arith.constant 0 : i32
    return %arg0, %c0_i32 : i32, i32
  }
}

</mosaic_0001>

<llo_original>
// kernel: mlp_classifier_forward.1
$region0: #{mlp_classifier_forward.1}
  #allocation0 [shape = 'u32[]', space=smem, size = 0x4, offset = 0x4, fixed_abs, tag = 'smem constant byte address 0x4 - core index']
  #allocation1 [shape = 'u32[72,128]{1,0:T(1,128)}', space=vmem, size = 0x9000, scoped, tag = 'internal scratch']
  %s0 = inlined_call_operand.vmem [shape: f32[8,1152], index: 0, kind: input, shape index: {}]
  %s1 = inlined_call_operand.hbm [shape: bf16[1152,128], index: 1, kind: input, shape index: {}]
  %s2 = inlined_call_operand.vmem [shape: f32[1,128], index: 2, kind: input, shape index: {}]
  %s3 = inlined_call_operand.vmem [shape: bf16[128,128], index: 3, kind: input, shape index: {}]
  %s4 = inlined_call_operand.vmem [shape: f32[1,128], index: 4, kind: input, shape index: {}]
  %s5 = inlined_call_operand.vmem [shape: bf16[128,2], index: 5, kind: input, shape index: {}]
  %s6 = inlined_call_operand.vmem [shape: f32[1,2], index: 6, kind: input, shape index: {}]
  %s7 = inlined_call_operand.vmem [shape: f32[8,2], index: 7, kind: output, shape index: {}]
  %s8 = sld [smem:[#allocation0]]
  $region42: #{mlp_classifier_forward.1} parent=0
    _
  %s10 = ssub.s32 1, %s8
  %s11 = scalar_select 0, %s10, %s8
  $region1: #{mlp_classifier_forward.1} parent=0
    #allocation2 [shape = 'u8[294912]{0}', space=vmem, size = 0x48000, scoped, tag = 'input window, operand 1, single buffered']
    #allocation3 [shape = 's32[1]{0}', space=sflag, size = 0x4, scoped, tag = 'scoped memory for mlp_classifier_forward.1']
    %12 = vsyncpa [#allocation3], 0
    // Predicated region
    $region2: #{mlp_classifier_forward.1} parent=1 // pred_check
      _
    $region3: #{mlp_classifier_forward.1} parent=1 // pred_check_branch
      %14 = sbr.rel (0) target = $region5
    $region4: #{mlp_classifier_forward.1} parent=1 // pred_region
      _
    $region5: #{mlp_classifier_forward.1} parent=1 // pred_fallthru
      _
    // Predicated region
    $region6: #{mlp_classifier_forward.1} parent=1 // pred_check
      _
    $region7: #{mlp_classifier_forward.1} parent=1 // pred_check_branch
      %16 = sbr.rel (0) target = $region9
    $region8: #{mlp_classifier_forward.1} parent=1 // pred_region
      %18 = vsyncadd [#allocation3], 0
      %s19 = sshll.u32 %s1, 4
      %s20 = int_to_ptr.hbm [resolvable:$true] %s19
      %s21 = sshll.u32 [#allocation2], 4
      %s22 = int_to_ptr.vmem [resolvable:$true] %s21
      %27 = dma.hbm_to_vmem [thread:$0]  %s20, 9216, %s22, [#allocation3], 64, 64, 4
    $region9: #{mlp_classifier_forward.1} parent=1 // pred_fallthru
      _
    // Predicated region
    $region10: #{mlp_classifier_forward.1} parent=1 // pred_check
      _
    $region11: #{mlp_classifier_forward.1} parent=1 // pred_check_branch
      %29 = sbr.rel (0) target = $region13
    $region12: #{mlp_classifier_forward.1} parent=1 // pred_region
      _
    $region13: #{mlp_classifier_forward.1} parent=1 // pred_fallthru
      _
    // Predicated region
    $region14: #{mlp_classifier_forward.1} parent=1 // pred_check
      _
    $region15: #{mlp_classifier_forward.1} parent=1 // pred_check_branch
      %31 = sbr.rel (0) target = $region17
    $region16: #{mlp_classifier_forward.1} parent=1 // pred_region
      _
    $region17: #{mlp_classifier_forward.1} parent=1 // pred_fallthru
      _
    // Predicated region
    $region18: #{mlp_classifier_forward.1} parent=1 // pred_check
      _
    $region19: #{mlp_classifier_forward.1} parent=1 // pred_check_branch
      %33 = sbr.rel (0) target = $region21
    $region20: #{mlp_classifier_forward.1} parent=1 // pred_region
      _
    $region21: #{mlp_classifier_forward.1} parent=1 // pred_fallthru
      _
    // Predicated region
    $region22: #{mlp_classifier_forward.1} parent=1 // pred_check
      _
    $region23: #{mlp_classifier_forward.1} parent=1 // pred_check_branch
      %35 = sbr.rel (0) target = $region25
    $region24: #{mlp_classifier_forward.1} parent=1 // pred_region
      _
    $region25: #{mlp_classifier_forward.1} parent=1 // pred_fallthru
      _
    // Predicated region
    $region26: #{mlp_classifier_forward.1} parent=1 // pred_check
      _
    $region27: #{mlp_classifier_forward.1} parent=1 // pred_check_branch
      %37 = sbr.rel (0) target = $region29
    $region28: #{mlp_classifier_forward.1} parent=1 // pred_region
      _
    $region29: #{mlp_classifier_forward.1} parent=1 // pred_fallthru
      _
    // Predicated region
    $region30: #{mlp_classifier_forward.1} parent=1 // pred_check
      _
    $region31: #{mlp_classifier_forward.1} parent=1 // pred_check_branch
      %39 = sbr.rel (0) target = $region33
    $region32: #{mlp_classifier_forward.1} parent=1 // pred_region
      %41 = dma.done [#allocation3], 9216
    $region33: #{mlp_classifier_forward.1} parent=1 // pred_fallthru
      _
    %v42 = vld [vmem:[%s0] sm:$0xff]
    %v43 = vld [vmem:[%s0 + $0x8] sm:$0xff]
    %v44 = vld [vmem:[%s0 + $0x10] sm:$0xff]
    %v45 = vld [vmem:[%s0 + $0x18] sm:$0xff]
    %v46 = vld [vmem:[%s0 + $0x20] sm:$0xff]
    %v47 = vld [vmem:[%s0 + $0x28] sm:$0xff]
    %v48 = vld [vmem:[%s0 + $0x30] sm:$0xff]
    %v49 = vld [vmem:[%s0 + $0x38] sm:$0xff]
    %v50 = vld [vmem:[%s0 + $0x40] sm:$0xff]
    %v51 = vpack.c.bf16 %v42, %v42
    %v52 = vpack.c.bf16 %v43, %v43
    %v53 = vpack.c.bf16 %v44, %v44
    %v54 = vpack.c.bf16 %v45, %v45
    %v55 = vpack.c.bf16 %v46, %v46
    %v56 = vpack.c.bf16 %v47, %v47
    %v57 = vpack.c.bf16 %v48, %v48
    %v58 = vpack.c.bf16 %v49, %v49
    %v59 = vpack.c.bf16 %v50, %v50
    %v60 = vld [vmem:[#allocation2] sm:$0xf]
    %v61 = vld [vmem:[#allocation2 + $0x4] sm:$0xf]
    %v62 = vld [vmem:[#allocation2 + $0x8] sm:$0xf]
    %v63 = vld [vmem:[#allocation2 + $0xc] sm:$0xf]
    %v64 = vld [vmem:[#allocation2 + $0x10] sm:$0xf]
    %v65 = vld [vmem:[#allocation2 + $0x14] sm:$0xf]
    %v66 = vld [vmem:[#allocation2 + $0x18] sm:$0xf]
    %v67 = vld [vmem:[#allocation2 + $0x1c] sm:$0xf]
    %v68 = vld [vmem:[#allocation2 + $0x20] sm:$0xf]
    %v69 = vld [vmem:[#allocation2 + $0x24] sm:$0xf]
    %v70 = vld [vmem:[#allocation2 + $0x28] sm:$0xf]
    %v71 = vld [vmem:[#allocation2 + $0x2c] sm:$0xf]
    %v72 = vld [vmem:[#allocation2 + $0x30] sm:$0xf]
    %v73 = vld [vmem:[#allocation2 + $0x34] sm:$0xf]
    %v74 = vld [vmem:[#allocation2 + $0x38] sm:$0xf]
    %v75 = vld [vmem:[#allocation2 + $0x3c] sm:$0xf]
    %v76 = vld [vmem:[#allocation2 + $0x40] sm:$0xf]
    %v77 = vld [vmem:[#allocation2 + $0x44] sm:$0xf]
    %v78 = vld [vmem:[#allocation2 + $0x48] sm:$0xf]
    %v79 = vld [vmem:[#allocation2 + $0x4c] sm:$0xf]
    %v80 = vld [vmem:[#allocation2 + $0x50] sm:$0xf]
    %v81 = vld [vmem:[#allocation2 + $0x54] sm:$0xf]
    %v82 = vld [vmem:[#allocation2 + $0x58] sm:$0xf]
    %v83 = vld [vmem:[#allocation2 + $0x5c] sm:$0xf]
    %v84 = vld [vmem:[#allocation2 + $0x60] sm:$0xf]
    %v85 = vld [vmem:[#allocation2 + $0x64] sm:$0xf]
    %v86 = vld [vmem:[#allocation2 + $0x68] sm:$0xf]
    %v87 = vld [vmem:[#allocation2 + $0x6c] sm:$0xf]
    %v88 = vld [vmem:[#allocation2 + $0x70] sm:$0xf]
    %v89 = vld [vmem:[#allocation2 + $0x74] sm:$0xf]
    %v90 = vld [vmem:[#allocation2 + $0x78] sm:$0xf]
    %v91 = vld [vmem:[#allocation2 + $0x7c] sm:$0xf]
    %v92 = vld [vmem:[#allocation2 + $0x80] sm:$0xf]
    %v93 = vld [vmem:[#allocation2 + $0x84] sm:$0xf]
    %v94 = vld [vmem:[#allocation2 + $0x88] sm:$0xf]
    %v95 = vld [vmem:[#allocation2 + $0x8c] sm:$0xf]
    %v96 = vld [vmem:[#allocation2 + $0x90] sm:$0xf]
    %v97 = vld [vmem:[#allocation2 + $0x94] sm:$0xf]
    %v98 = vld [vmem:[#allocation2 + $0x98] sm:$0xf]
    %v99 = vld [vmem:[#allocation2 + $0x9c] sm:$0xf]
    %v100 = vld [vmem:[#allocation2 + $0xa0] sm:$0xf]
    %v101 = vld [vmem:[#allocation2 + $0xa4] sm:$0xf]
    %v102 = vld [vmem:[#allocation2 + $0xa8] sm:$0xf]
    %v103 = vld [vmem:[#allocation2 + $0xac] sm:$0xf]
    %v104 = vld [vmem:[#allocation2 + $0xb0] sm:$0xf]
    %v105 = vld [vmem:[#allocation2 + $0xb4] sm:$0xf]
    %v106 = vld [vmem:[#allocation2 + $0xb8] sm:$0xf]
    %v107 = vld [vmem:[#allocation2 + $0xbc] sm:$0xf]
    %v108 = vld [vmem:[#allocation2 + $0xc0] sm:$0xf]
    %v109 = vld [vmem:[#allocation2 + $0xc4] sm:$0xf]
    %v110 = vld [vmem:[#allocation2 + $0xc8] sm:$0xf]
    %v111 = vld [vmem:[#allocation2 + $0xcc] sm:$0xf]
    %v112 = vld [vmem:[#allocation2 + $0xd0] sm:$0xf]
    %v113 = vld [vmem:[#allocation2 + $0xd4] sm:$0xf]
    %v114 = vld [vmem:[#allocation2 + $0xd8] sm:$0xf]
    %v115 = vld [vmem:[#allocation2 + $0xdc] sm:$0xf]
    %v116 = vld [vmem:[#allocation2 + $0xe0] sm:$0xf]
    %v117 = vld [vmem:[#allocation2 + $0xe4] sm:$0xf]
    %v118 = vld [vmem:[#allocation2 + $0xe8] sm:$0xf]
    %v119 = vld [vmem:[#allocation2 + $0xec] sm:$0xf]
    %v120 = vld [vmem:[#allocation2 + $0xf0] sm:$0xf]
    %v121 = vld [vmem:[#allocation2 + $0xf4] sm:$0xf]
    %v122 = vld [vmem:[#allocation2 + $0xf8] sm:$0xf]
    %v123 = vld [vmem:[#allocation2 + $0xfc] sm:$0xf]
    %v124 = vld [vmem:[#allocation2 + $0x100] sm:$0xf]
    %v125 = vld [vmem:[#allocation2 + $0x104] sm:$0xf]
    %v126 = vld [vmem:[#allocation2 + $0x108] sm:$0xf]
    %v127 = vld [vmem:[#allocation2 + $0x10c] sm:$0xf]
    %v128 = vld [vmem:[#allocation2 + $0x110] sm:$0xf]
    %v129 = vld [vmem:[#allocation2 + $0x114] sm:$0xf]
    %v130 = vld [vmem:[#allocation2 + $0x118] sm:$0xf]
    %v131 = vld [vmem:[#allocation2 + $0x11c] sm:$0xf]
    %v132 = vld [vmem:[#allocation2 + $0x120] sm:$0xf]
    %v133 = vld [vmem:[#allocation2 + $0x124] sm:$0xf]
    %v134 = vld [vmem:[#allocation2 + $0x128] sm:$0xf]
    %v135 = vld [vmem:[#allocation2 + $0x12c] sm:$0xf]
    %v136 = vld [vmem:[#allocation2 + $0x130] sm:$0xf]
    %v137 = vld [vmem:[#allocation2 + $0x134] sm:$0xf]
    %v138 = vld [vmem:[#allocation2 + $0x138] sm:$0xf]
    %v139 = vld [vmem:[#allocation2 + $0x13c] sm:$0xf]
    %v140 = vld [vmem:[#allocation2 + $0x140] sm:$0xf]
    %v141 = vld [vmem:[#allocation2 + $0x144] sm:$0xf]
    %v142 = vld [vmem:[#allocation2 + $0x148] sm:$0xf]
    %v143 = vld [vmem:[#allocation2 + $0x14c] sm:$0xf]
    %v144 = vld [vmem:[#allocation2 + $0x150] sm:$0xf]
    %v145 = vld [vmem:[#allocation2 + $0x154] sm:$0xf]
    %v146 = vld [vmem:[#allocation2 + $0x158] sm:$0xf]
    %v147 = vld [vmem:[#allocation2 + $0x15c] sm:$0xf]
    %v148 = vld [vmem:[#allocation2 + $0x160] sm:$0xf]
    %v149 = vld [vmem:[#allocation2 + $0x164] sm:$0xf]
    %v150 = vld [vmem:[#allocation2 + $0x168] sm:$0xf]
    %v151 = vld [vmem:[#allocation2 + $0x16c] sm:$0xf]
    %v152 = vld [vmem:[#allocation2 + $0x170] sm:$0xf]
    %v153 = vld [vmem:[#allocation2 + $0x174] sm:$0xf]
    %v154 = vld [vmem:[#allocation2 + $0x178] sm:$0xf]
    %v155 = vld [vmem:[#allocation2 + $0x17c] sm:$0xf]
    %v156 = vld [vmem:[#allocation2 + $0x180] sm:$0xf]
    %v157 = vld [vmem:[#allocation2 + $0x184] sm:$0xf]
    %v158 = vld [vmem:[#allocation2 + $0x188] sm:$0xf]
    %v159 = vld [vmem:[#allocation2 + $0x18c] sm:$0xf]
    %v160 = vld [vmem:[#allocation2 + $0x190] sm:$0xf]
    %v161 = vld [vmem:[#allocation2 + $0x194] sm:$0xf]
    %v162 = vld [vmem:[#allocation2 + $0x198] sm:$0xf]
    %v163 = vld [vmem:[#allocation2 + $0x19c] sm:$0xf]
    %v164 = vld [vmem:[#allocation2 + $0x1a0] sm:$0xf]
    %v165 = vld [vmem:[#allocation2 + $0x1a4] sm:$0xf]
    %v166 = vld [vmem:[#allocation2 + $0x1a8] sm:$0xf]
    %v167 = vld [vmem:[#allocation2 + $0x1ac] sm:$0xf]
    %v168 = vld [vmem:[#allocation2 + $0x1b0] sm:$0xf]
    %v169 = vld [vmem:[#allocation2 + $0x1b4] sm:$0xf]
    %v170 = vld [vmem:[#allocation2 + $0x1b8] sm:$0xf]
    %v171 = vld [vmem:[#allocation2 + $0x1bc] sm:$0xf]
    %v172 = vld [vmem:[#allocation2 + $0x1c0] sm:$0xf]
    %v173 = vld [vmem:[#allocation2 + $0x1c4] sm:$0xf]
    %v174 = vld [vmem:[#allocation2 + $0x1c8] sm:$0xf]
    %v175 = vld [vmem:[#allocation2 + $0x1cc] sm:$0xf]
    %v176 = vld [vmem:[#allocation2 + $0x1d0] sm:$0xf]
    %v177 = vld [vmem:[#allocation2 + $0x1d4] sm:$0xf]
    %v178 = vld [vmem:[#allocation2 + $0x1d8] sm:$0xf]
    %v179 = vld [vmem:[#allocation2 + $0x1dc] sm:$0xf]
    %v180 = vld [vmem:[#allocation2 + $0x1e0] sm:$0xf]
    %v181 = vld [vmem:[#allocation2 + $0x1e4] sm:$0xf]
    %v182 = vld [vmem:[#allocation2 + $0x1e8] sm:$0xf]
    %v183 = vld [vmem:[#allocation2 + $0x1ec] sm:$0xf]
    %v184 = vld [vmem:[#allocation2 + $0x1f0] sm:$0xf]
    %v185 = vld [vmem:[#allocation2 + $0x1f4] sm:$0xf]
    %v186 = vld [vmem:[#allocation2 + $0x1f8] sm:$0xf]
    %v187 = vld [vmem:[#allocation2 + $0x1fc] sm:$0xf]
    %v188 = vld [vmem:[#allocation2 + $0x200] sm:$0xf]
    %v189 = vld [vmem:[#allocation2 + $0x204] sm:$0xf]
    %v190 = vld [vmem:[#allocation2 + $0x208] sm:$0xf]
    %v191 = vld [vmem:[#allocation2 + $0x20c] sm:$0xf]
    %v192 = vld [vmem:[#allocation2 + $0x210] sm:$0xf]
    %v193 = vld [vmem:[#allocation2 + $0x214] sm:$0xf]
    %v194 = vld [vmem:[#allocation2 + $0x218] sm:$0xf]
    %v195 = vld [vmem:[#allocation2 + $0x21c] sm:$0xf]
    %v196 = vld [vmem:[#allocation2 + $0x220] sm:$0xf]
    %v197 = vld [vmem:[#allocation2 + $0x224] sm:$0xf]
    %v198 = vld [vmem:[#allocation2 + $0x228] sm:$0xf]
    %v199 = vld [vmem:[#allocation2 + $0x22c] sm:$0xf]
    %v200 = vld [vmem:[#allocation2 + $0x230] sm:$0xf]
    %v201 = vld [vmem:[#allocation2 + $0x234] sm:$0xf]
    %v202 = vld [vmem:[#allocation2 + $0x238] sm:$0xf]
    %v203 = vld [vmem:[#allocation2 + $0x23c] sm:$0xf]
    %v204 = vld [vmem:[%s2] sm:$0x1]
    %v206 = vperm.slane %v204, 0
    %v352 = vunpack.c.l.b16 %v60
    %v353 = vunpack.c.l.b16 %v61
    %v354 = vunpack.c.l.b16 %v62
    %v355 = vunpack.c.l.b16 %v63
    %v356 = vunpack.c.l.b16 %v64
    %v357 = vunpack.c.l.b16 %v65
    %v358 = vunpack.c.l.b16 %v66
    %v359 = vunpack.c.l.b16 %v67
    %v360 = vunpack.c.l.b16 %v68
    %v361 = vunpack.c.l.b16 %v69
    %v362 = vunpack.c.l.b16 %v70
    %v363 = vunpack.c.l.b16 %v71
    %v364 = vunpack.c.l.b16 %v72
    %v365 = vunpack.c.l.b16 %v73
    %v366 = vunpack.c.l.b16 %v74
    %v367 = vunpack.c.l.b16 %v75
    %v368 = vunpack.c.l.b16 %v76
    %v369 = vunpack.c.l.b16 %v77
    %v370 = vunpack.c.l.b16 %v78
    %v371 = vunpack.c.l.b16 %v79
    %v372 = vunpack.c.l.b16 %v80
    %v373 = vunpack.c.l.b16 %v81
    %v374 = vunpack.c.l.b16 %v82
    %v375 = vunpack.c.l.b16 %v83
    %v376 = vunpack.c.l.b16 %v84
    %v377 = vunpack.c.l.b16 %v85
    %v378 = vunpack.c.l.b16 %v86
    %v379 = vunpack.c.l.b16 %v87
    %v380 = vunpack.c.l.b16 %v88
    %v381 = vunpack.c.l.b16 %v89
    %v382 = vunpack.c.l.b16 %v90
    %v383 = vunpack.c.l.b16 %v91
    %v384 = vunpack.c.l.b16 %v92
    %v385 = vunpack.c.l.b16 %v93
    %v386 = vunpack.c.l.b16 %v94
    %v387 = vunpack.c.l.b16 %v95
    %v388 = vunpack.c.l.b16 %v96
    %v389 = vunpack.c.l.b16 %v97
    %v390 = vunpack.c.l.b16 %v98
    %v391 = vunpack.c.l.b16 %v99
    %v392 = vunpack.c.l.b16 %v100
    %v393 = vunpack.c.l.b16 %v101
    %v394 = vunpack.c.l.b16 %v102
    %v395 = vunpack.c.l.b16 %v103
    %v396 = vunpack.c.l.b16 %v104
    %v397 = vunpack.c.l.b16 %v105
    %v398 = vunpack.c.l.b16 %v106
    %v399 = vunpack.c.l.b16 %v107
    %v400 = vunpack.c.l.b16 %v108
    %v401 = vunpack.c.l.b16 %v109
    %v402 = vunpack.c.l.b16 %v110
    %v403 = vunpack.c.l.b16 %v111
    %v404 = vunpack.c.l.b16 %v112
    %v405 = vunpack.c.l.b16 %v113
    %v406 = vunpack.c.l.b16 %v114
    %v407 = vunpack.c.l.b16 %v115
    %v408 = vunpack.c.l.b16 %v116
    %v409 = vunpack.c.l.b16 %v117
    %v410 = vunpack.c.l.b16 %v118
    %v411 = vunpack.c.l.b16 %v119
    %v412 = vunpack.c.l.b16 %v120
    %v413 = vunpack.c.l.b16 %v121
    %v414 = vunpack.c.l.b16 %v122
    %v415 = vunpack.c.l.b16 %v123
    %v416 = vunpack.c.l.b16 %v124
    %v417 = vunpack.c.l.b16 %v125
    %v418 = vunpack.c.l.b16 %v126
    %v419 = vunpack.c.l.b16 %v127
    %v420 = vunpack.c.l.b16 %v128
    %v421 = vunpack.c.l.b16 %v129
    %v422 = vunpack.c.l.b16 %v130
    %v423 = vunpack.c.l.b16 %v131
    %v424 = vunpack.c.l.b16 %v132
    %v425 = vunpack.c.l.b16 %v133
    %v426 = vunpack.c.l.b16 %v134
    %v427 = vunpack.c.l.b16 %v135
    %v428 = vunpack.c.l.b16 %v136
    %v429 = vunpack.c.l.b16 %v137
    %v430 = vunpack.c.l.b16 %v138
    %v431 = vunpack.c.l.b16 %v139
    %v432 = vunpack.c.l.b16 %v140
    %v433 = vunpack.c.l.b16 %v141
    %v434 = vunpack.c.l.b16 %v142
    %v435 = vunpack.c.l.b16 %v143
    %v436 = vunpack.c.l.b16 %v144
    %v437 = vunpack.c.l.b16 %v145
    %v438 = vunpack.c.l.b16 %v146
    %v439 = vunpack.c.l.b16 %v147
    %v440 = vunpack.c.l.b16 %v148
    %v441 = vunpack.c.l.b16 %v149
    %v442 = vunpack.c.l.b16 %v150
    %v443 = vunpack.c.l.b16 %v151
    %v444 = vunpack.c.l.b16 %v152
    %v445 = vunpack.c.l.b16 %v153
    %v446 = vunpack.c.l.b16 %v154
    %v447 = vunpack.c.l.b16 %v155
    %v448 = vunpack.c.l.b16 %v156
    %v449 = vunpack.c.l.b16 %v157
    %v450 = vunpack.c.l.b16 %v158
    %v451 = vunpack.c.l.b16 %v159
    %v452 = vunpack.c.l.b16 %v160
    %v453 = vunpack.c.l.b16 %v161
    %v454 = vunpack.c.l.b16 %v162
    %v455 = vunpack.c.l.b16 %v163
    %v456 = vunpack.c.l.b16 %v164
    %v457 = vunpack.c.l.b16 %v165
    %v458 = vunpack.c.l.b16 %v166
    %v459 = vunpack.c.l.b16 %v167
    %v460 = vunpack.c.l.b16 %v168
    %v461 = vunpack.c.l.b16 %v169
    %v462 = vunpack.c.l.b16 %v170
    %v463 = vunpack.c.l.b16 %v171
    %v464 = vunpack.c.l.b16 %v172
    %v465 = vunpack.c.l.b16 %v173
    %v466 = vunpack.c.l.b16 %v174
    %v467 = vunpack.c.l.b16 %v175
    %v468 = vunpack.c.l.b16 %v176
    %v469 = vunpack.c.l.b16 %v177
    %v470 = vunpack.c.l.b16 %v178
    %v471 = vunpack.c.l.b16 %v179
    %v472 = vunpack.c.l.b16 %v180
    %v473 = vunpack.c.l.b16 %v181
    %v474 = vunpack.c.l.b16 %v182
    %v475 = vunpack.c.l.b16 %v183
    %v476 = vunpack.c.l.b16 %v184
    %v477 = vunpack.c.l.b16 %v185
    %v478 = vunpack.c.l.b16 %v186
    %v479 = vunpack.c.l.b16 %v187
    %v480 = vunpack.c.l.b16 %v188
    %v481 = vunpack.c.l.b16 %v189
    %v482 = vunpack.c.l.b16 %v190
    %v483 = vunpack.c.l.b16 %v191
    %v484 = vunpack.c.l.b16 %v192
    %v485 = vunpack.c.l.b16 %v193
    %v486 = vunpack.c.l.b16 %v194
    %v487 = vunpack.c.l.b16 %v195
    %v488 = vunpack.c.l.b16 %v196
    %v489 = vunpack.c.l.b16 %v197
    %v490 = vunpack.c.l.b16 %v198
    %v491 = vunpack.c.l.b16 %v199
    %v492 = vunpack.c.l.b16 %v200
    %v493 = vunpack.c.l.b16 %v201
    %v494 = vunpack.c.l.b16 %v202
    %v495 = vunpack.c.l.b16 %v203
    %v496 = vpack.c.b16 %v353, %v352
    %v497 = vpack.c.b16 %v355, %v354
    %v498 = vpack.c.b16 %v357, %v356
    %v499 = vpack.c.b16 %v359, %v358
    %v500 = vpack.c.b16 %v361, %v360
    %v501 = vpack.c.b16 %v363, %v362
    %v502 = vpack.c.b16 %v365, %v364
    %v503 = vpack.c.b16 %v367, %v366
    %v504 = vpack.c.b16 %v369, %v368
    %v505 = vpack.c.b16 %v371, %v370
    %v506 = vpack.c.b16 %v373, %v372
    %v507 = vpack.c.b16 %v375, %v374
    %v508 = vpack.c.b16 %v377, %v376
    %v509 = vpack.c.b16 %v379, %v378
    %v510 = vpack.c.b16 %v381, %v380
    %v511 = vpack.c.b16 %v383, %v382
    %v512 = vpack.c.b16 %v385, %v384
    %v513 = vpack.c.b16 %v387, %v386
    %v514 = vpack.c.b16 %v389, %v388
    %v515 = vpack.c.b16 %v391, %v390
    %v516 = vpack.c.b16 %v393, %v392
    %v517 = vpack.c.b16 %v395, %v394
    %v518 = vpack.c.b16 %v397, %v396
    %v519 = vpack.c.b16 %v399, %v398
    %v520 = vpack.c.b16 %v401, %v400
    %v521 = vpack.c.b16 %v403, %v402
    %v522 = vpack.c.b16 %v405, %v404
    %v523 = vpack.c.b16 %v407, %v406
    %v524 = vpack.c.b16 %v409, %v408
    %v525 = vpack.c.b16 %v411, %v410
    %v526 = vpack.c.b16 %v413, %v412
    %v527 = vpack.c.b16 %v415, %v414
    %v528 = vpack.c.b16 %v417, %v416
    %v529 = vpack.c.b16 %v419, %v418
    %v530 = vpack.c.b16 %v421, %v420
    %v531 = vpack.c.b16 %v423, %v422
    %v532 = vpack.c.b16 %v425, %v424
    %v533 = vpack.c.b16 %v427, %v426
    %v534 = vpack.c.b16 %v429, %v428
    %v535 = vpack.c.b16 %v431, %v430
    %v536 = vpack.c.b16 %v433, %v432
    %v537 = vpack.c.b16 %v435, %v434
    %v538 = vpack.c.b16 %v437, %v436
    %v539 = vpack.c.b16 %v439, %v438
    %v540 = vpack.c.b16 %v441, %v440
    %v541 = vpack.c.b16 %v443, %v442
    %v542 = vpack.c.b16 %v445, %v444
    %v543 = vpack.c.b16 %v447, %v446
    %v544 = vpack.c.b16 %v449, %v448
    %v545 = vpack.c.b16 %v451, %v450
    %v546 = vpack.c.b16 %v453, %v452
    %v547 = vpack.c.b16 %v455, %v454
    %v548 = vpack.c.b16 %v457, %v456
    %v549 = vpack.c.b16 %v459, %v458
    %v550 = vpack.c.b16 %v461, %v460
    %v551 = vpack.c.b16 %v463, %v462
    %v552 = vpack.c.b16 %v465, %v464
    %v553 = vpack.c.b16 %v467, %v466
    %v554 = vpack.c.b16 %v469, %v468
    %v555 = vpack.c.b16 %v471, %v470
    %v556 = vpack.c.b16 %v473, %v472
    %v557 = vpack.c.b16 %v475, %v474
    %v558 = vpack.c.b16 %v477, %v476
    %v559 = vpack.c.b16 %v479, %v478
    %v560 = vpack.c.b16 %v481, %v480
    %v561 = vpack.c.b16 %v483, %v482
    %v562 = vpack.c.b16 %v485, %v484
    %v563 = vpack.c.b16 %v487, %v486
    %v564 = vpack.c.b16 %v489, %v488
    %v565 = vpack.c.b16 %v491, %v490
    %v566 = vpack.c.b16 %v493, %v492
    %v567 = vpack.c.b16 %v495, %v494
    %640 = vmatpush.bf16.msra.mxu0 %v503
    %641 = vmatpush.bf16.msra.mxu0 %v502
    %642 = vmatpush.bf16.msra.mxu0 %v501
    %643 = vmatpush.bf16.msra.mxu0 %v500
    %644 = vmatpush.bf16.msra.mxu0 %v499
    %645 = vmatpush.bf16.msra.mxu0 %v498
    %646 = vmatpush.bf16.msra.mxu0 %v497
    %647 = vmatpush.bf16.msra.mxu0 %v496
    %648 = vmatmul.bf16.gmra.mxu0 %v51
    %v649 = vpop.f32.mrf.mxu0
    %v650 = vadd.f32 %v206, %v649
    %v651 = vpop.f32.mrf.mxu0
    %652 = vdwg.mxu0
    %653 = vmatpush.bf16.msra.mxu0 %v511
    %654 = vmatpush.bf16.msra.mxu0 %v510
    %655 = vmatpush.bf16.msra.mxu0 %v509
    %656 = vmatpush.bf16.msra.mxu0 %v508
    %657 = vmatpush.bf16.msra.mxu0 %v507
    %658 = vmatpush.bf16.msra.mxu0 %v506
    %659 = vmatpush.bf16.msra.mxu0 %v505
    %660 = vmatpush.bf16.msra.mxu0 %v504
    %661 = vmatmul.bf16.gmra.mxu0 %v52
    %v662 = vpop.f32.mrf.mxu0
    %v663 = vadd.f32 %v650, %v662
    %v664 = vpop.f32.mrf.mxu0
    %665 = vdwg.mxu0
    %666 = vmatpush.bf16.msra.mxu0 %v519
    %667 = vmatpush.bf16.msra.mxu0 %v518
    %668 = vmatpush.bf16.msra.mxu0 %v517
    %669 = vmatpush.bf16.msra.mxu0 %v516
    %670 = vmatpush.bf16.msra.mxu0 %v515
    %671 = vmatpush.bf16.msra.mxu0 %v514
    %672 = vmatpush.bf16.msra.mxu0 %v513
    %673 = vmatpush.bf16.msra.mxu0 %v512
    %674 = vmatmul.bf16.gmra.mxu0 %v53
    %v675 = vpop.f32.mrf.mxu0
    %v676 = vadd.f32 %v663, %v675
    %v677 = vpop.f32.mrf.mxu0
    %678 = vdwg.mxu0
    %679 = vmatpush.bf16.msra.mxu0 %v527
    %680 = vmatpush.bf16.msra.mxu0 %v526
    %681 = vmatpush.bf16.msra.mxu0 %v525
    %682 = vmatpush.bf16.msra.mxu0 %v524
    %683 = vmatpush.bf16.msra.mxu0 %v523
    %684 = vmatpush.bf16.msra.mxu0 %v522
    %685 = vmatpush.bf16.msra.mxu0 %v521
    %686 = vmatpush.bf16.msra.mxu0 %v520
    %687 = vmatmul.bf16.gmra.mxu0 %v54
    %v688 = vpop.f32.mrf.mxu0
    %v689 = vadd.f32 %v676, %v688
    %v690 = vpop.f32.mrf.mxu0
    %691 = vdwg.mxu0
    %692 = vmatpush.bf16.msra.mxu0 %v535
    %693 = vmatpush.bf16.msra.mxu0 %v534
    %694 = vmatpush.bf16.msra.mxu0 %v533
    %695 = vmatpush.bf16.msra.mxu0 %v532
    %696 = vmatpush.bf16.msra.mxu0 %v531
    %697 = vmatpush.bf16.msra.mxu0 %v530
    %698 = vmatpush.bf16.msra.mxu0 %v529
    %699 = vmatpush.bf16.msra.mxu0 %v528
    %700 = vmatmul.bf16.gmra.mxu0 %v55
    %v701 = vpop.f32.mrf.mxu0
    %v702 = vadd.f32 %v689, %v701
    %v703 = vpop.f32.mrf.mxu0
    %704 = vdwg.mxu0
    %705 = vmatpush.bf16.msra.mxu0 %v543
    %706 = vmatpush.bf16.msra.mxu0 %v542
    %707 = vmatpush.bf16.msra.mxu0 %v541
    %708 = vmatpush.bf16.msra.mxu0 %v540
    %709 = vmatpush.bf16.msra.mxu0 %v539
    %710 = vmatpush.bf16.msra.mxu0 %v538
    %711 = vmatpush.bf16.msra.mxu0 %v537
    %712 = vmatpush.bf16.msra.mxu0 %v536
    %713 = vmatmul.bf16.gmra.mxu0 %v56
    %v714 = vpop.f32.mrf.mxu0
    %v715 = vadd.f32 %v702, %v714
    %v716 = vpop.f32.mrf.mxu0
    %717 = vdwg.mxu0
    %718 = vmatpush.bf16.msra.mxu0 %v551
    %719 = vmatpush.bf16.msra.mxu0 %v550
    %720 = vmatpush.bf16.msra.mxu0 %v549
    %721 = vmatpush.bf16.msra.mxu0 %v548
    %722 = vmatpush.bf16.msra.mxu0 %v547
    %723 = vmatpush.bf16.msra.mxu0 %v546
    %724 = vmatpush.bf16.msra.mxu0 %v545
    %725 = vmatpush.bf16.msra.mxu0 %v544
    %726 = vmatmul.bf16.gmra.mxu0 %v57
    %v727 = vpop.f32.mrf.mxu0
    %v728 = vadd.f32 %v715, %v727
    %v729 = vpop.f32.mrf.mxu0
    %730 = vdwg.mxu0
    %731 = vmatpush.bf16.msra.mxu0 %v559
    %732 = vmatpush.bf16.msra.mxu0 %v558
    %733 = vmatpush.bf16.msra.mxu0 %v557
    %734 = vmatpush.bf16.msra.mxu0 %v556
    %735 = vmatpush.bf16.msra.mxu0 %v555
    %736 = vmatpush.bf16.msra.mxu0 %v554
    %737 = vmatpush.bf16.msra.mxu0 %v553
    %738 = vmatpush.bf16.msra.mxu0 %v552
    %739 = vmatmul.bf16.gmra.mxu0 %v58
    %v740 = vpop.f32.mrf.mxu0
    %v741 = vadd.f32 %v728, %v740
    %v742 = vpop.f32.mrf.mxu0
    %743 = vdwg.mxu0
    %744 = vmatpush.bf16.msra.mxu0 %v567
    %745 = vmatpush.bf16.msra.mxu0 %v566
    %746 = vmatpush.bf16.msra.mxu0 %v565
    %747 = vmatpush.bf16.msra.mxu0 %v564
    %748 = vmatpush.bf16.msra.mxu0 %v563
    %749 = vmatpush.bf16.msra.mxu0 %v562
    %750 = vmatpush.bf16.msra.mxu0 %v561
    %751 = vmatpush.bf16.msra.mxu0 %v560
    %752 = vmatmul.bf16.gmra.mxu0 %v59
    %v753 = vpop.f32.mrf.mxu0
    %v754 = vadd.f32 %v741, %v753
    %v755 = vpop.f32.mrf.mxu0
    %756 = vdwg.mxu0
    %v757 = vmax.f32 %v754, 0.0
    %v758 = vpack.c.bf16 %v757, %v757
    %v759 = vld [vmem:[%s3] sm:$0xf]
    %v760 = vld [vmem:[%s3 + $0x4] sm:$0xf]
    %v761 = vld [vmem:[%s3 + $0x8] sm:$0xf]
    %v762 = vld [vmem:[%s3 + $0xc] sm:$0xf]
    %v763 = vld [vmem:[%s3 + $0x10] sm:$0xf]
    %v764 = vld [vmem:[%s3 + $0x14] sm:$0xf]
    %v765 = vld [vmem:[%s3 + $0x18] sm:$0xf]
    %v766 = vld [vmem:[%s3 + $0x1c] sm:$0xf]
    %v767 = vld [vmem:[%s3 + $0x20] sm:$0xf]
    %v768 = vld [vmem:[%s3 + $0x24] sm:$0xf]
    %v769 = vld [vmem:[%s3 + $0x28] sm:$0xf]
    %v770 = vld [vmem:[%s3 + $0x2c] sm:$0xf]
    %v771 = vld [vmem:[%s3 + $0x30] sm:$0xf]
    %v772 = vld [vmem:[%s3 + $0x34] sm:$0xf]
    %v773 = vld [vmem:[%s3 + $0x38] sm:$0xf]
    %v774 = vld [vmem:[%s3 + $0x3c] sm:$0xf]
    %v775 = vld [vmem:[%s4] sm:$0x1]
    %v777 = vperm.slane %v775, 0
    %v795 = vunpack.c.l.b16 %v759
    %v796 = vunpack.c.l.b16 %v760
    %v797 = vunpack.c.l.b16 %v761
    %v798 = vunpack.c.l.b16 %v762
    %v799 = vunpack.c.l.b16 %v763
    %v800 = vunpack.c.l.b16 %v764
    %v801 = vunpack.c.l.b16 %v765
    %v802 = vunpack.c.l.b16 %v766
    %v803 = vunpack.c.l.b16 %v767
    %v804 = vunpack.c.l.b16 %v768
    %v805 = vunpack.c.l.b16 %v769
    %v806 = vunpack.c.l.b16 %v770
    %v807 = vunpack.c.l.b16 %v771
    %v808 = vunpack.c.l.b16 %v772
    %v809 = vunpack.c.l.b16 %v773
    %v810 = vunpack.c.l.b16 %v774
    %v811 = vpack.c.b16 %v796, %v795
    %v812 = vpack.c.b16 %v798, %v797
    %v813 = vpack.c.b16 %v800, %v799
    %v814 = vpack.c.b16 %v802, %v801
    %v815 = vpack.c.b16 %v804, %v803
    %v816 = vpack.c.b16 %v806, %v805
    %v817 = vpack.c.b16 %v808, %v807
    %v818 = vpack.c.b16 %v810, %v809
    %827 = vmatpush.bf16.msra.mxu0 %v818
    %828 = vmatpush.bf16.msra.mxu0 %v817
    %829 = vmatpush.bf16.msra.mxu0 %v816
    %830 = vmatpush.bf16.msra.mxu0 %v815
    %831 = vmatpush.bf16.msra.mxu0 %v814
    %832 = vmatpush.bf16.msra.mxu0 %v813
    %833 = vmatpush.bf16.msra.mxu0 %v812
    %834 = vmatpush.bf16.msra.mxu0 %v811
    %835 = vmatmul.bf16.gmra.mxu0 %v758
    %v836 = vpop.f32.mrf.mxu0
    %v837 = vadd.f32 %v777, %v836
    %v838 = vpop.f32.mrf.mxu0
    %839 = vdwg.mxu0
    %v840 = vmax.f32 %v837, 0.0
    %v841 = vpack.c.bf16 %v840, %v840
    %v842 = vld [vmem:[%s5] sm:$0xf]
    %v843 = vld [vmem:[%s5 + $0x4] sm:$0xf]
    %v844 = vld [vmem:[%s5 + $0x8] sm:$0xf]
    %v845 = vld [vmem:[%s5 + $0xc] sm:$0xf]
    %v846 = vld [vmem:[%s5 + $0x10] sm:$0xf]
    %v847 = vld [vmem:[%s5 + $0x14] sm:$0xf]
    %v848 = vld [vmem:[%s5 + $0x18] sm:$0xf]
    %v849 = vld [vmem:[%s5 + $0x1c] sm:$0xf]
    %v850 = vld [vmem:[%s5 + $0x20] sm:$0xf]
    %v851 = vld [vmem:[%s5 + $0x24] sm:$0xf]
    %v852 = vld [vmem:[%s5 + $0x28] sm:$0xf]
    %v853 = vld [vmem:[%s5 + $0x2c] sm:$0xf]
    %v854 = vld [vmem:[%s5 + $0x30] sm:$0xf]
    %v855 = vld [vmem:[%s5 + $0x34] sm:$0xf]
    %v856 = vld [vmem:[%s5 + $0x38] sm:$0xf]
    %v857 = vld [vmem:[%s5 + $0x3c] sm:$0xf]
    %v858 = vld [vmem:[%s6] sm:$0x1]
    %v860 = vperm.slane %v858, 0
    %v878 = vunpack.c.l.b16 %v842
    %v879 = vunpack.c.l.b16 %v843
    %v880 = vunpack.c.l.b16 %v844
    %v881 = vunpack.c.l.b16 %v845
    %v882 = vunpack.c.l.b16 %v846
    %v883 = vunpack.c.l.b16 %v847
    %v884 = vunpack.c.l.b16 %v848
    %v885 = vunpack.c.l.b16 %v849
    %v886 = vunpack.c.l.b16 %v850
    %v887 = vunpack.c.l.b16 %v851
    %v888 = vunpack.c.l.b16 %v852
    %v889 = vunpack.c.l.b16 %v853
    %v890 = vunpack.c.l.b16 %v854
    %v891 = vunpack.c.l.b16 %v855
    %v892 = vunpack.c.l.b16 %v856
    %v893 = vunpack.c.l.b16 %v857
    %v894 = vpack.c.b16 %v879, %v878
    %v895 = vpack.c.b16 %v881, %v880
    %v896 = vpack.c.b16 %v883, %v882
    %v897 = vpack.c.b16 %v885, %v884
    %v898 = vpack.c.b16 %v887, %v886
    %v899 = vpack.c.b16 %v889, %v888
    %v900 = vpack.c.b16 %v891, %v890
    %v901 = vpack.c.b16 %v893, %v892
    %910 = vmatpush.bf16.msra.mxu0 %v901
    %911 = vmatpush.bf16.msra.mxu0 %v900
    %912 = vmatpush.bf16.msra.mxu0 %v899
    %913 = vmatpush.bf16.msra.mxu0 %v898
    %914 = vmatpush.bf16.msra.mxu0 %v897
    %915 = vmatpush.bf16.msra.mxu0 %v896
    %916 = vmatpush.bf16.msra.mxu0 %v895
    %917 = vmatpush.bf16.msra.mxu0 %v894
    %918 = vmatmul.bf16.gmra.mxu0 %v841
    %v919 = vpop.f32.mrf.mxu0
    %v920 = vadd.f32 %v860, %v919
    %v921 = vpop.f32.mrf.mxu0
    %922 = vdwg.mxu0
    %vm923 = vcmask 15360
    %924 = vst.msk [vmem:[%s7] sm:$0xff] %vm923, %v920
    // Predicated region
    $region34: #{mlp_classifier_forward.1} parent=1 // pred_check
      _
    $region35: #{mlp_classifier_forward.1} parent=1 // pred_check_branch
      %926 = sbr.rel (0) target = $region37
    $region36: #{mlp_classifier_forward.1} parent=1 // pred_region
      _
    $region37: #{mlp_classifier_forward.1} parent=1 // pred_fallthru
      _
    // Predicated region
    $region38: #{mlp_classifier_forward.1} parent=1 // pred_check
      _
    $region39: #{mlp_classifier_forward.1} parent=1 // pred_check_branch
      %928 = sbr.rel (0) target = $region41
    $region40: #{mlp_classifier_forward.1} parent=1 // pred_region
      _
    $region41: #{mlp_classifier_forward.1} parent=1 // pred_fallthru
      _
    %929 = vsyncpa [#allocation3], 1

</llo_original>
